<compile_context>
chip_gen: v6e
topology: v6e:2x2x1
jax: 0.10.0
libtpu: 0.0.40
codegen_flags: <defaults>
</compile_context>

<pallas_src>
import functools

import jax
import jax.numpy as jnp
import numpy as np
from jax.experimental import pallas as pl
from jax.experimental.pallas import tpu as pltpu


def _round_up(x, m):
    return ((x + m - 1) // m) * m


def fm_kernel(bias_ref, uid_ref, iid_ref, eu_ref, ei_ref, w_ref, msq_ref, mlin_ref, o_ref):
    # bias_ref : (1,)  f32 SMEM           linear bias
    # uid_ref  : (1, TB) int32            user ids for this tile (batch on lanes)
    # iid_ref  : (1, TB) int32            item ids for this tile
    # eu_ref   : (D, Up) f32  resident    user embedding table, transposed + lane padded
    # ei_ref   : (D, Ip) f32  resident    item embedding table, transposed + lane padded
    # w_ref    : (4, MR, D) f32 resident  [Wx_user, Wx_item, Wq_user, Wq_item]
    #              rows < K of Wx_* : sqrt(0.5) * v^T          (factor rows)
    #              row  = K of Wx_* : w_lin                    (linear row)
    #              row  = K of Wq_* : -0.5 * sum_f v^2         (collapsed ip2 row)
    # msq_ref  : (MR, 1) f32              1.0 on factor rows (< K), else 0
    # mlin_ref : (MR, 1) f32              1.0 on the linear row (== K), else 0
    # o_ref    : (1, TB) f32              lane-dense output row
    d_up = eu_ref.shape[1]
    d_ip = ei_ref.shape[1]
    tb = uid_ref.shape[1]

    # In-kernel embedding gather: one-hot matmuls against the resident transposed
    # tables. Result is already (D, TB) = features-on-sublanes / batch-on-lanes.
    oh_u = (jax.lax.broadcasted_iota(jnp.int32, (d_up, tb), 0)
            == uid_ref[...]).astype(jnp.float32)                          # (Up, TB)
    oh_i = (jax.lax.broadcasted_iota(jnp.int32, (d_ip, tb), 0)
            == iid_ref[...]).astype(jnp.float32)                          # (Ip, TB)
    u = jnp.dot(eu_ref[...], oh_u, preferred_element_type=jnp.float32)    # (D, TB)
    it = jnp.dot(ei_ref[...], oh_i, preferred_element_type=jnp.float32)   # (D, TB)

    # Fused FM matmul with only MR(=16) output rows (default MXU precision, f32 acc):
    #   rows < K : sqrt(0.5) * ip1_f
    #   row  = K : linear (no bias) - 0.5 * sum_f ip2_f
    r = (jnp.dot(w_ref[0], u, preferred_element_type=jnp.float32)
         + jnp.dot(w_ref[1], it, preferred_element_type=jnp.float32)
         + jnp.dot(w_ref[2], u * u, preferred_element_type=jnp.float32)
         + jnp.dot(w_ref[3], it * it, preferred_element_type=jnp.float32))  # (MR, TB)

    # Combine: squaring the sqrt(0.5)-scaled factor rows yields 0.5*ip1^2; the linear
    # row passes through; padded rows are exactly zero under both masks.
    t = r * r * msq_ref[...] + r * mlin_ref[...]                           # (MR, TB)

    # 16-deep sublane reduce -> lane-resident (1, TB) result, stored lane-dense.
    o_ref[...] = jnp.sum(t, axis=0, keepdims=True) + bias_ref[0]


@functools.partial(jax.jit, static_argnames=("tb",))
def fm_forward(u_id, i_id, params, *, tb=2048):
    user_emb = params["user_emb"].astype(jnp.float32)             # (U, D)
    item_emb = params["item_emb"].astype(jnp.float32)             # (I, D)
    v = params["v"].astype(jnp.float32)                           # (P, K)
    lin_w = params["lin_w"].astype(jnp.float32).reshape(-1)       # (P,)
    bias = params["lin_b"].astype(jnp.float32).reshape(1)         # (1,)

    B = u_id.shape[0]
    U, D = user_emb.shape
    I = item_emb.shape[0]
    P = 2 * D
    K = v.shape[1]
    assert v.shape[0] == P and lin_w.shape[0] == P

    MR = max(8, _round_up(K + 1, 8))   # K factor rows + 1 linear/ip2 row, sublane-padded

    # --- batch tiling: lane-dense tiles (multiples of 128); padded batch always a
    # multiple of 128; >=2 grid steps when possible (keeps both v7x TCs busy).
    tb_eff = max(128, (tb // 128) * 128)
    Bp = _round_up(B, 128)
    if Bp <= tb_eff:
        tb_eff = Bp // 2 if (Bp % 256 == 0 and Bp >= 256) else Bp
    else:
        Bp = _round_up(Bp, tb_eff)
    num_tiles = Bp // tb_eff

    # Ids stream as int32 lane rows (padded entries gather row 0; sliced off below).
    uid = jnp.pad(u_id.astype(jnp.int32), (0, Bp - B)).reshape(1, Bp)
    iid = jnp.pad(i_id.astype(jnp.int32), (0, Bp - B)).reshape(1, Bp)

    # --- resident transposed, lane-padded embedding tables (fit VMEM at these sizes).
    # TODO(synk): for vocabularies whose tables do not fit VMEM, switch to a
    # scalar-prefetched id list + per-row DMA gather from HBM (memory_space=pl.ANY),
    # streaming the rows as bf16 on v6e/v7x.
    Up = _round_up(U, 128)
    Ip = _round_up(I, 128)
    assert D * (Up + Ip) * 4 <= 8 * 1024 * 1024, "tables too large for resident-VMEM gather"
    eu_t = jnp.zeros((D, Up), jnp.float32).at[:, :U].set(user_emb.T)
    ei_t = jnp.zeros((D, Ip), jnp.float32).at[:, :I].set(item_emb.T)

    # --- fused FM weights: ip2 collapsed to one row via s_p = sum_f v[p,f]^2,
    # 0.5 factors folded in (v scaled by sqrt(0.5), s scaled by -0.5).
    s = jnp.sum(v * v, axis=1)                                     # (P,)
    c = np.float32(np.sqrt(0.5))
    wx_u = (jnp.zeros((MR, D), jnp.float32)
            .at[:K, :].set(c * v[:D, :].T).at[K, :].set(lin_w[:D]))
    wx_i = (jnp.zeros((MR, D), jnp.float32)
            .at[:K, :].set(c * v[D:, :].T).at[K, :].set(lin_w[D:]))
    wq_u = jnp.zeros((MR, D), jnp.float32).at[K, :].set(-0.5 * s[:D])
    wq_i = jnp.zeros((MR, D), jnp.float32).at[K, :].set(-0.5 * s[D:])
    w_all = jnp.stack([wx_u, wx_i, wq_u, wq_i])                    # (4, MR, D)

    msq = jnp.zeros((MR, 1), jnp.float32).at[:K, 0].set(1.0)
    mlin = jnp.zeros((MR, 1), jnp.float32).at[K, 0].set(1.0)

    out = pl.pallas_call(
        fm_kernel,
        out_shape=jax.ShapeDtypeStruct((1, Bp), jnp.float32),
        grid=(num_tiles,),
        in_specs=[
            pl.BlockSpec(memory_space=pltpu.MemorySpace.SMEM),     # linear bias (scalar)
            pl.BlockSpec((1, tb_eff), lambda i: (0, i)),           # user ids tile
            pl.BlockSpec((1, tb_eff), lambda i: (0, i)),           # item ids tile
            pl.BlockSpec((D, Up), lambda i: (0, 0)),               # user table (resident)
            pl.BlockSpec((D, Ip), lambda i: (0, 0)),               # item table (resident)
            pl.BlockSpec((4, MR, D), lambda i: (0, 0, 0)),         # fused FM weights (resident)
            pl.BlockSpec((MR, 1), lambda i: (0, 0)),               # factor-row mask
            pl.BlockSpec((MR, 1), lambda i: (0, 0)),               # linear-row mask
        ],
        out_specs=pl.BlockSpec((1, tb_eff), lambda i: (0, i)),     # lane-dense output row
        compiler_params=pltpu.CompilerParams(
            dimension_semantics=("parallel",)),
    )(bias, uid, iid, eu_t, ei_t, w_all, msq, mlin)

    return out.reshape(-1)[:B].reshape(B, 1)


def fm_reference(u_id, i_id, params):
    hp = jax.lax.Precision.HIGHEST
    u_vec = params["user_emb"][u_id]
    i_vec = params["item_emb"][i_id]
    x = jnp.concatenate([u_vec, i_vec], axis=1)
    linear = jnp.dot(x, params["lin_w"].T, precision=hp) + params["lin_b"]    # (B, 1)
    ip1 = jnp.dot(x, params["v"], precision=hp)
    ip2 = jnp.dot(x * x, params["v"] * params["v"], precision=hp)
    pair = jnp.sum(ip1 * ip1 - ip2, axis=1, keepdims=True)
    return linear + 0.5 * pair


if __name__ == "__main__":
    key = jax.random.PRNGKey(0)
    U_LEN, I_LEN = 50, 40          # vocabulary sizes for user/item embeddings
    D = 16                         # id_embedding_dim
    P, K = 2 * D, 10               # FactorizationMachine(p=2*D, k=10)
    B = 200                        # not a multiple of 128 -> exercises padding + 2 grid steps

    ks = jax.random.split(key, 8)
    params = {
        "user_emb": 0.01 * jax.random.normal(ks[0], (U_LEN, D), jnp.float32),
        "item_emb": 0.01 * jax.random.normal(ks[1], (I_LEN, D), jnp.float32),
        # nn.Linear(P, 1): weight (1, P), bias (1,)
        "lin_w": 0.1 * jax.random.normal(ks[2], (1, P), jnp.float32),
        "lin_b": 0.1 * jax.random.normal(ks[3], (1,), jnp.float32),
        # PyTorch inits self.v to zeros; use nonzero values so the pairwise path is exercised.
        "v": 0.1 * jax.random.normal(ks[4], (P, K), jnp.float32),
        # Unused in forward (kept for parity with the module's __init__):
        "user_bias": jnp.zeros((U_LEN, 1), jnp.float32),
        "item_bias": jnp.zeros((I_LEN, 1), jnp.float32),
        "global_bias": jnp.zeros((1,), jnp.float32),
    }

    u_id = jax.random.randint(ks[5], (B,), 0, U_LEN)
    i_id = jax.random.randint(ks[6], (B,), 0, I_LEN)

    out = fm_forward(u_id, i_id, params)           # -> 2 "parallel" 128-lane tiles
    out = jax.block_until_ready(out)

    ref = fm_reference(u_id, i_id, params)
    # Tolerance relaxed vs. the f32-HIGHEST reference: the kernel uses default
    # (bf16-pass) MXU precision with f32 accumulation, per the perf review.
    np.testing.assert_allclose(np.asarray(out), np.asarray(ref), rtol=1e-2, atol=2e-3)
    assert out.shape == (B, 1)

    print("KERNEL_OK")
</pallas_src>

<mosaic_0001>
module attributes {stable_mosaic.version = 11 : i64} {
  func.func @fm_kernel(%arg0: i32, %arg1: memref<1xf32, #tpu.memory_space<smem>>, %arg2: memref<1x128xi32, #tpu.memory_space<vmem>>, %arg3: memref<1x128xi32, #tpu.memory_space<vmem>>, %arg4: memref<16x128xf32, #tpu.memory_space<vmem>>, %arg5: memref<16x128xf32, #tpu.memory_space<vmem>>, %arg6: memref<4x16x16xf32, #tpu.memory_space<vmem>>, %arg7: memref<16x1xf32, #tpu.memory_space<vmem>>, %arg8: memref<16x1xf32, #tpu.memory_space<vmem>>, %arg9: memref<1x128xf32, #tpu.memory_space<vmem>>) attributes {dimension_semantics = [#tpu.dimension_semantics<parallel>], iteration_bounds = array<i64: 2>, scalar_prefetch = 0 : i64, scratch_operands = 0 : i64, tpu.core_type = #tpu.core_type<tc>, window_params = [{transform_indices = @transform_0, window_bounds = array<i64: 1>}, {transform_indices = @transform_1, window_bounds = array<i64: 1, 128>}, {transform_indices = @transform_2, window_bounds = array<i64: 1, 128>}, {pipeline_mode = #tpu.pipeline_mode<synchronous>, transform_indices = @transform_3, window_bounds = array<i64: 16, 128>}, {pipeline_mode = #tpu.pipeline_mode<synchronous>, transform_indices = @transform_4, window_bounds = array<i64: 16, 128>}, {pipeline_mode = #tpu.pipeline_mode<synchronous>, transform_indices = @transform_5, window_bounds = array<i64: 4, 16, 16>}, {pipeline_mode = #tpu.pipeline_mode<synchronous>, transform_indices = @transform_6, window_bounds = array<i64: 16, 1>}, {pipeline_mode = #tpu.pipeline_mode<synchronous>, transform_indices = @transform_7, window_bounds = array<i64: 16, 1>}, {transform_indices = @transform_8, window_bounds = array<i64: 1, 128>}]} {
    %0 = tpu.iota {dimensions = array<i32: 0>} : vector<128x128xi32>
    %c0 = arith.constant 0 : index
    %c0_0 = arith.constant 0 : index
    %1 = vector.load %arg2[%c0, %c0_0] : memref<1x128xi32, #tpu.memory_space<vmem>>, vector<1x128xi32>
    %2 = vector.broadcast %1 : vector<1x128xi32> to vector<128x128xi32>
    %3 = arith.cmpi eq, %0, %2 : vector<128x128xi32>
    %4 = arith.extui %3 : vector<128x128xi1> to vector<128x128xi32>
    %5 = arith.sitofp %4 : vector<128x128xi32> to vector<128x128xf32>
    %6 = tpu.iota {dimensions = array<i32: 0>} : vector<128x128xi32>
    %c0_1 = arith.constant 0 : index
    %c0_2 = arith.constant 0 : index
    %7 = vector.load %arg3[%c0_1, %c0_2] : memref<1x128xi32, #tpu.memory_space<vmem>>, vector<1x128xi32>
    %8 = vector.broadcast %7 : vector<1x128xi32> to vector<128x128xi32>
    %9 = arith.cmpi eq, %6, %8 : vector<128x128xi32>
    %10 = arith.extui %9 : vector<128x128xi1> to vector<128x128xi32>
    %11 = arith.sitofp %10 : vector<128x128xi32> to vector<128x128xf32>
    %c0_3 = arith.constant 0 : index
    %c0_4 = arith.constant 0 : index
    %12 = vector.load %arg4[%c0_3, %c0_4] : memref<16x128xf32, #tpu.memory_space<vmem>>, vector<16x128xf32>
    %cst = arith.constant dense<0.000000e+00> : vector<16x128xf32>
    %13 = tpu.matmul %12, %5, %cst {dimension_numbers = #tpu.dot_dimension_numbers<[1], [0], [0], [1], [0, 0, 1, 1], [], []>} : vector<16x128xf32>, vector<128x128xf32>, vector<16x128xf32> -> vector<16x128xf32>
    %c0_5 = arith.constant 0 : index
    %c0_6 = arith.constant 0 : index
    %14 = vector.load %arg5[%c0_5, %c0_6] : memref<16x128xf32, #tpu.memory_space<vmem>>, vector<16x128xf32>
    %cst_7 = arith.constant dense<0.000000e+00> : vector<16x128xf32>
    %15 = tpu.matmul %14, %11, %cst_7 {dimension_numbers = #tpu.dot_dimension_numbers<[1], [0], [0], [1], [0, 0, 1, 1], [], []>} : vector<16x128xf32>, vector<128x128xf32>, vector<16x128xf32> -> vector<16x128xf32>
    %c0_8 = arith.constant 0 : index
    %c0_9 = arith.constant 0 : index
    %c0_10 = arith.constant 0 : index
    %16 = vector.load %arg6[%c0_8, %c0_9, %c0_10] : memref<4x16x16xf32, #tpu.memory_space<vmem>>, vector<1x16x16xf32>
    %17 = vector.shape_cast %16 : vector<1x16x16xf32> to vector<16x16xf32>
    %cst_11 = arith.constant dense<0.000000e+00> : vector<16x128xf32>
    %18 = tpu.matmul %17, %13, %cst_11 {dimension_numbers = #tpu.dot_dimension_numbers<[1], [0], [0], [1], [0, 0, 1, 1], [], []>} : vector<16x16xf32>, vector<16x128xf32>, vector<16x128xf32> -> vector<16x128xf32>
    %c1 = arith.constant 1 : index
    %c0_12 = arith.constant 0 : index
    %c0_13 = arith.constant 0 : index
    %19 = vector.load %arg6[%c1, %c0_12, %c0_13] : memref<4x16x16xf32, #tpu.memory_space<vmem>>, vector<1x16x16xf32>
    %20 = vector.shape_cast %19 : vector<1x16x16xf32> to vector<16x16xf32>
    %cst_14 = arith.constant dense<0.000000e+00> : vector<16x128xf32>
    %21 = tpu.matmul %20, %15, %cst_14 {dimension_numbers = #tpu.dot_dimension_numbers<[1], [0], [0], [1], [0, 0, 1, 1], [], []>} : vector<16x16xf32>, vector<16x128xf32>, vector<16x128xf32> -> vector<16x128xf32>
    %22 = arith.addf %18, %21 : vector<16x128xf32>
    %c2 = arith.constant 2 : index
    %c0_15 = arith.constant 0 : index
    %c0_16 = arith.constant 0 : index
    %23 = vector.load %arg6[%c2, %c0_15, %c0_16] : memref<4x16x16xf32, #tpu.memory_space<vmem>>, vector<1x16x16xf32>
    %24 = vector.shape_cast %23 : vector<1x16x16xf32> to vector<16x16xf32>
    %25 = arith.mulf %13, %13 : vector<16x128xf32>
    %cst_17 = arith.constant dense<0.000000e+00> : vector<16x128xf32>
    %26 = tpu.matmul %24, %25, %cst_17 {dimension_numbers = #tpu.dot_dimension_numbers<[1], [0], [0], [1], [0, 0, 1, 1], [], []>} : vector<16x16xf32>, vector<16x128xf32>, vector<16x128xf32> -> vector<16x128xf32>
    %27 = arith.addf %22, %26 : vector<16x128xf32>
    %c3 = arith.constant 3 : index
    %c0_18 = arith.constant 0 : index
    %c0_19 = arith.constant 0 : index
    %28 = vector.load %arg6[%c3, %c0_18, %c0_19] : memref<4x16x16xf32, #tpu.memory_space<vmem>>, vector<1x16x16xf32>
    %29 = vector.shape_cast %28 : vector<1x16x16xf32> to vector<16x16xf32>
    %30 = arith.mulf %15, %15 : vector<16x128xf32>
    %cst_20 = arith.constant dense<0.000000e+00> : vector<16x128xf32>
    %31 = tpu.matmul %29, %30, %cst_20 {dimension_numbers = #tpu.dot_dimension_numbers<[1], [0], [0], [1], [0, 0, 1, 1], [], []>} : vector<16x16xf32>, vector<16x128xf32>, vector<16x128xf32> -> vector<16x128xf32>
    %32 = arith.addf %27, %31 : vector<16x128xf32>
    %33 = arith.mulf %32, %32 : vector<16x128xf32>
    %c0_21 = arith.constant 0 : index
    %c0_22 = arith.constant 0 : index
    %34 = vector.load %arg7[%c0_21, %c0_22] : memref<16x1xf32, #tpu.memory_space<vmem>>, vector<16x1xf32>
    %35 = vector.broadcast %34 : vector<16x1xf32> to vector<16x128xf32>
    %36 = arith.mulf %33, %35 : vector<16x128xf32>
    %c0_23 = arith.constant 0 : index
    %c0_24 = arith.constant 0 : index
    %37 = vector.load %arg8[%c0_23, %c0_24] : memref<16x1xf32, #tpu.memory_space<vmem>>, vector<16x1xf32>
    %38 = vector.broadcast %37 : vector<16x1xf32> to vector<16x128xf32>
    %39 = arith.mulf %32, %38 : vector<16x128xf32>
    %40 = arith.addf %36, %39 : vector<16x128xf32>
    %cst_25 = arith.constant dense<0.000000e+00> : vector<128xf32>
    %41 = vector.multi_reduction <add>, %40, %cst_25 [0] : vector<16x128xf32> to vector<128xf32>
    %42 = vector.shape_cast %41 : vector<128xf32> to vector<1x128xf32>
    %c0_26 = arith.constant 0 : index
    %43 = memref.load %arg1[%c0_26] : memref<1xf32, #tpu.memory_space<smem>>
    %44 = vector.broadcast %43 : f32 to vector<1x128xf32>
    %45 = arith.addf %42, %44 : vector<1x128xf32>
    %c0_27 = arith.constant 0 : index
    %c0_28 = arith.constant 0 : index
    %46 = vector.load %arg9[%c0_27, %c0_28] : memref<1x128xf32, #tpu.memory_space<vmem>>, vector<1x128xf32>
    tpu.vector_store %arg9[%c0_27, %c0_28], %45 {strides = array<i32>} : memref<1x128xf32, #tpu.memory_space<vmem>>, vector<1x128xf32>,
    return
  }
  func.func @transform_0(%arg0: i32) -> i32 {
    %c0_i32 = arith.constant 0 : i32
    %c0_i32_0 = arith.constant 0 : i32
    return %c0_i32 : i32
  }
  func.func @transform_1(%arg0: i32) -> (i32, i32) {
    %c0_i32 = arith.constant 0 : i32
    %c0_i32_0 = arith.constant 0 : i32
    return %c0_i32, %arg0 : i32, i32
  }
  func.func @transform_2(%arg0: i32) -> (i32, i32) {
    %c0_i32 = arith.constant 0 : i32
    %c0_i32_0 = arith.constant 0 : i32
    return %c0_i32, %arg0 : i32, i32
  }
  func.func @transform_3(%arg0: i32) -> (i32, i32) {
    %c0_i32 = arith.constant 0 : i32
    %c0_i32_0 = arith.constant 0 : i32
    %c0_i32_1 = arith.constant 0 : i32
    return %c0_i32, %c0_i32_0 : i32, i32
  }
  func.func @transform_4(%arg0: i32) -> (i32, i32) {
    %c0_i32 = arith.constant 0 : i32
    %c0_i32_0 = arith.constant 0 : i32
    %c0_i32_1 = arith.constant 0 : i32
    return %c0_i32, %c0_i32_0 : i32, i32
  }
  func.func @transform_5(%arg0: i32) -> (i32, i32, i32) {
    %c0_i32 = arith.constant 0 : i32
    %c0_i32_0 = arith.constant 0 : i32
    %c0_i32_1 = arith.constant 0 : i32
    %c0_i32_2 = arith.constant 0 : i32
    return %c0_i32, %c0_i32_0, %c0_i32_1 : i32, i32, i32
  }
  func.func @transform_6(%arg0: i32) -> (i32, i32) {
    %c0_i32 = arith.constant 0 : i32
    %c0_i32_0 = arith.constant 0 : i32
    %c0_i32_1 = arith.constant 0 : i32
    return %c0_i32, %c0_i32_0 : i32, i32
  }
  func.func @transform_7(%arg0: i32) -> (i32, i32) {
    %c0_i32 = arith.constant 0 : i32
    %c0_i32_0 = arith.constant 0 : i32
    %c0_i32_1 = arith.constant 0 : i32
    return %c0_i32, %c0_i32_0 : i32, i32
  }
  func.func @transform_8(%arg0: i32) -> (i32, i32) {
    %c0_i32 = arith.constant 0 : i32
    %c0_i32_0 = arith.constant 0 : i32
    return %c0_i32, %arg0 : i32, i32
  }
}

</mosaic_0001>

<llo_original>
// kernel: fm_forward.1
$region0: #{fm_forward.1}
  #allocation0 [shape = 'u32[]', space=smem, size = 0x4, offset = 0x4, fixed_abs, tag = 'smem constant byte address 0x4 - core index']
  #allocation1 [shape = 'u32[144,128]{1,0:T(1,128)}', space=vmem, size = 0x12000, scoped, tag = 'internal scratch']
  #allocation2 [shape = 'f32[1]{0:T(128)S(6)}', space=smem, size = 0x200, scoped, tag = 'scoped memory for fm_forward.1']
  %s0 = inlined_call_operand.<no memory space> [shape: f32[1], index: 0, kind: input, shape index: {}]
  %s1 = inlined_call_operand.vmem [shape: s32[1,256], index: 1, kind: input, shape index: {}]
  %s2 = inlined_call_operand.vmem [shape: s32[1,256], index: 2, kind: input, shape index: {}]
  %s3 = inlined_call_operand.vmem [shape: f32[16,128], index: 3, kind: input, shape index: {}]
  %s4 = inlined_call_operand.vmem [shape: f32[16,128], index: 4, kind: input, shape index: {}]
  %s5 = inlined_call_operand.vmem [shape: f32[4,16,16], index: 5, kind: input, shape index: {}]
  %s6 = inlined_call_operand.vmem [shape: f32[16,1], index: 6, kind: input, shape index: {}]
  %s7 = inlined_call_operand.vmem [shape: f32[16,1], index: 7, kind: input, shape index: {}]
  %s8 = inlined_call_operand.vmem [shape: f32[1,256], index: 8, kind: output, shape index: {}]
  %s9 = sld [smem:[#allocation0]]
  $region65: #{fm_forward.1} parent=0
    _
  %s11 = ssub.s32 1, %s9
  %s12 = scalar_select 0, %s11, %s9
  %13 = sst [smem:[#allocation2]] %s0
  loop: start=0, step=1, limit=4
  $region2: #{fm_forward.1} parent=0 // loop_pre_header
    _
  $region3: #{fm_forward.1} parent=0 // loop_header
    %s15 = sphi 0, %s19
    %p16 = scmp.ge.s32.totalorder %s15, 4
    %s23 = sphi 0, %s23
    %s25 = sphi 0, %s23
    %s26 = sphi 0, %s25
    %s40 = sphi 0, %s26
    %s46 = sphi 0, %s48
    %s49 = sphi 0, %s46
    %s50 = sphi 0, %s49
    %s66 = sphi 0, %s50
    %s72 = sphi 0, %s74
    %s75 = sphi 0, %s72
    %s76 = sphi 0, %s75
    %s92 = sphi 0, %s76
    %s96 = sphi 0, %s96
    %s98 = sphi 0, %s96
    %s99 = sphi 0, %s98
    %s113 = sphi 0, %s99
    %s117 = sphi 0, %s117
    %s119 = sphi 0, %s117
    %s120 = sphi 0, %s119
    %s134 = sphi 0, %s120
    %s138 = sphi 0, %s138
    %s140 = sphi 0, %s138
    %s141 = sphi 0, %s140
    %s155 = sphi 0, %s141
    %s159 = sphi 0, %s159
    %s161 = sphi 0, %s159
    %s162 = sphi 0, %s161
    %s176 = sphi 0, %s162
    %s180 = sphi 0, %s180
    %s182 = sphi 0, %s180
    %s183 = sphi 0, %s182
    %s197 = sphi 0, %s183
    %s203 = sphi 0, %s205
    %s206 = sphi 0, %s203
    %s207 = sphi 0, %s206
    %s223 = sphi 0, %s207
  $region4: #{fm_forward.1} parent=0 // loop_header_branch
    %18 = sbr.rel (%p16) target = $region8
  $region5: #{fm_forward.1} parent=0 // loop_body
    %s20 = ssub.s32 %s15, 1
    %s21 = ssub.s32 %s15, 2
    %s22 = sadd.s32 %s15, 1
    %s24 = sadd.s32 %s23, 1
    %p27 = scmp.eq.s32.totalorder %s15, 1
    %p28 = scmp.ne.s32.totalorder %s23, %s25
    %p29 = scmp.eq.s32.totalorder %s15, 0
    %p30 = por %p28, %p29
    %p31 = scmp.ne.s32.totalorder %s23, %s25
    %p32 = scmp.eq.s32.totalorder %s20, 1
    %p33 = por %p31, %p32
    %p34 = scmp.ne.s32.totalorder %s25, %s26
    %p35 = scmp.eq.s32.totalorder %s20, 0
    %p36 = por %p34, %p35
    %p37 = scmp.ne.s32.totalorder %s25, %s26
    %p38 = scmp.eq.s32.totalorder %s21, 1
    %p39 = por %p37, %p38
    %p41 = scmp.ne.s32.totalorder %s26, %s40
    %p42 = scmp.eq.s32.totalorder %s21, 0
    %p43 = por %p41, %p42
    %s44 = ssub.s32 %s15, %s22
    %p45 = scmp.eq.s32.totalorder %s44, 0
    %s47 = sadd.s32 %s46, 1
    %s48 = scalar_select %p45, %s46, %s47
    %p51 = pneg %p45
    %p52 = scmp.eq.s32.totalorder %s15, 1
    %p53 = por %p51, %p52
    %p54 = scmp.ne.s32.totalorder %s46, %s49
    %p55 = scmp.eq.s32.totalorder %s15, 0
    %p56 = por %p54, %p55
    %p57 = scmp.ne.s32.totalorder %s46, %s49
    %p58 = scmp.eq.s32.totalorder %s20, 1
    %p59 = por %p57, %p58
    %p60 = scmp.ne.s32.totalorder %s49, %s50
    %p61 = scmp.eq.s32.totalorder %s20, 0
    %p62 = por %p60, %p61
    %p63 = scmp.ne.s32.totalorder %s49, %s50
    %p64 = scmp.eq.s32.totalorder %s21, 1
    %p65 = por %p63, %p64
    %p67 = scmp.ne.s32.totalorder %s50, %s66
    %p68 = scmp.eq.s32.totalorder %s21, 0
    %p69 = por %p67, %p68
    %s70 = ssub.s32 %s15, %s22
    %p71 = scmp.eq.s32.totalorder %s70, 0
    %s73 = sadd.s32 %s72, 1
    %s74 = scalar_select %p71, %s72, %s73
    %p77 = pneg %p71
    %p78 = scmp.eq.s32.totalorder %s15, 1
    %p79 = por %p77, %p78
    %p80 = scmp.ne.s32.totalorder %s72, %s75
    %p81 = scmp.eq.s32.totalorder %s15, 0
    %p82 = por %p80, %p81
    %p83 = scmp.ne.s32.totalorder %s72, %s75
    %p84 = scmp.eq.s32.totalorder %s20, 1
    %p85 = por %p83, %p84
    %p86 = scmp.ne.s32.totalorder %s75, %s76
    %p87 = scmp.eq.s32.totalorder %s20, 0
    %p88 = por %p86, %p87
    %p89 = scmp.ne.s32.totalorder %s75, %s76
    %p90 = scmp.eq.s32.totalorder %s21, 1
    %p91 = por %p89, %p90
    %p93 = scmp.ne.s32.totalorder %s76, %s92
    %p94 = scmp.eq.s32.totalorder %s21, 0
    %p95 = por %p93, %p94
    %s97 = sadd.s32 %s96, 1
    %p100 = scmp.eq.s32.totalorder %s15, 1
    %p101 = scmp.ne.s32.totalorder %s96, %s98
    %p102 = scmp.eq.s32.totalorder %s15, 0
    %p103 = por %p101, %p102
    %p104 = scmp.ne.s32.totalorder %s96, %s98
    %p105 = scmp.eq.s32.totalorder %s20, 1
    %p106 = por %p104, %p105
    %p107 = scmp.ne.s32.totalorder %s98, %s99
    %p108 = scmp.eq.s32.totalorder %s20, 0
    %p109 = por %p107, %p108
    %p110 = scmp.ne.s32.totalorder %s98, %s99
    %p111 = scmp.eq.s32.totalorder %s21, 1
    %p112 = por %p110, %p111
    %p114 = scmp.ne.s32.totalorder %s99, %s113
    %p115 = scmp.eq.s32.totalorder %s21, 0
    %p116 = por %p114, %p115
    %s118 = sadd.s32 %s117, 1
    %p121 = scmp.eq.s32.totalorder %s15, 1
    %p122 = scmp.ne.s32.totalorder %s117, %s119
    %p123 = scmp.eq.s32.totalorder %s15, 0
    %p124 = por %p122, %p123
    %p125 = scmp.ne.s32.totalorder %s117, %s119
    %p126 = scmp.eq.s32.totalorder %s20, 1
    %p127 = por %p125, %p126
    %p128 = scmp.ne.s32.totalorder %s119, %s120
    %p129 = scmp.eq.s32.totalorder %s20, 0
    %p130 = por %p128, %p129
    %p131 = scmp.ne.s32.totalorder %s119, %s120
    %p132 = scmp.eq.s32.totalorder %s21, 1
    %p133 = por %p131, %p132
    %p135 = scmp.ne.s32.totalorder %s120, %s134
    %p136 = scmp.eq.s32.totalorder %s21, 0
    %p137 = por %p135, %p136
    %s139 = sadd.s32 %s138, 1
    %p142 = scmp.eq.s32.totalorder %s15, 1
    %p143 = scmp.ne.s32.totalorder %s138, %s140
    %p144 = scmp.eq.s32.totalorder %s15, 0
    %p145 = por %p143, %p144
    %p146 = scmp.ne.s32.totalorder %s138, %s140
    %p147 = scmp.eq.s32.totalorder %s20, 1
    %p148 = por %p146, %p147
    %p149 = scmp.ne.s32.totalorder %s140, %s141
    %p150 = scmp.eq.s32.totalorder %s20, 0
    %p151 = por %p149, %p150
    %p152 = scmp.ne.s32.totalorder %s140, %s141
    %p153 = scmp.eq.s32.totalorder %s21, 1
    %p154 = por %p152, %p153
    %p156 = scmp.ne.s32.totalorder %s141, %s155
    %p157 = scmp.eq.s32.totalorder %s21, 0
    %p158 = por %p156, %p157
    %s160 = sadd.s32 %s159, 1
    %p163 = scmp.eq.s32.totalorder %s15, 1
    %p164 = scmp.ne.s32.totalorder %s159, %s161
    %p165 = scmp.eq.s32.totalorder %s15, 0
    %p166 = por %p164, %p165
    %p167 = scmp.ne.s32.totalorder %s159, %s161
    %p168 = scmp.eq.s32.totalorder %s20, 1
    %p169 = por %p167, %p168
    %p170 = scmp.ne.s32.totalorder %s161, %s162
    %p171 = scmp.eq.s32.totalorder %s20, 0
    %p172 = por %p170, %p171
    %p173 = scmp.ne.s32.totalorder %s161, %s162
    %p174 = scmp.eq.s32.totalorder %s21, 1
    %p175 = por %p173, %p174
    %p177 = scmp.ne.s32.totalorder %s162, %s176
    %p178 = scmp.eq.s32.totalorder %s21, 0
    %p179 = por %p177, %p178
    %s181 = sadd.s32 %s180, 1
    %p184 = scmp.eq.s32.totalorder %s15, 1
    %p185 = scmp.ne.s32.totalorder %s180, %s182
    %p186 = scmp.eq.s32.totalorder %s15, 0
    %p187 = por %p185, %p186
    %p188 = scmp.ne.s32.totalorder %s180, %s182
    %p189 = scmp.eq.s32.totalorder %s20, 1
    %p190 = por %p188, %p189
    %p191 = scmp.ne.s32.totalorder %s182, %s183
    %p192 = scmp.eq.s32.totalorder %s20, 0
    %p193 = por %p191, %p192
    %p194 = scmp.ne.s32.totalorder %s182, %s183
    %p195 = scmp.eq.s32.totalorder %s21, 1
    %p196 = por %p194, %p195
    %p198 = scmp.ne.s32.totalorder %s183, %s197
    %p199 = scmp.eq.s32.totalorder %s21, 0
    %p200 = por %p198, %p199
    %s201 = ssub.s32 %s15, %s22
    %p202 = scmp.eq.s32.totalorder %s201, 0
    %s204 = sadd.s32 %s203, 1
    %s205 = scalar_select %p202, %s203, %s204
    %p208 = pneg %p202
    %p209 = scmp.eq.s32.totalorder %s15, 1
    %p210 = por %p208, %p209
    %p211 = scmp.ne.s32.totalorder %s203, %s206
    %p212 = scmp.eq.s32.totalorder %s15, 0
    %p213 = por %p211, %p212
    %p214 = scmp.ne.s32.totalorder %s203, %s206
    %p215 = scmp.eq.s32.totalorder %s20, 1
    %p216 = por %p214, %p215
    %p217 = scmp.ne.s32.totalorder %s206, %s207
    %p218 = scmp.eq.s32.totalorder %s20, 0
    %p219 = por %p217, %p218
    %p220 = scmp.ne.s32.totalorder %s206, %s207
    %p221 = scmp.eq.s32.totalorder %s21, 1
    %p222 = por %p220, %p221
    %p224 = scmp.ne.s32.totalorder %s207, %s223
    %p225 = scmp.eq.s32.totalorder %s21, 0
    %p226 = por %p224, %p225
    %p227 = scmp.le.s32.totalorder 1, %s15
    %p228 = scmp.lt.s32.totalorder %s15, 3
    %p229 = pnand %p227, %p228
    %p230 = pneg %p229
    // Predicated region
    $region9: #{fm_forward.1} parent=5 // pred_check
      _
    $region10: #{fm_forward.1} parent=5 // pred_check_branch
      %232 = sbr.rel (%p229) target = $region12
    $region11: #{fm_forward.1} parent=5 // pred_region
      %s233 = ssub.s32 %s15, 1
      // Predicated region
      $region13: #{fm_forward.1} parent=11 // pred_check
        %p234 = pneg %p36
      $region14: #{fm_forward.1} parent=11 // pred_check_branch
        %236 = sbr.rel (%p234) target = $region16
      $region15: #{fm_forward.1} parent=11 // pred_region
        _
      $region16: #{fm_forward.1} parent=11 // pred_fallthru
        _
      // Predicated region
      $region17: #{fm_forward.1} parent=11 // pred_check
        %p237 = pneg %p109
      $region18: #{fm_forward.1} parent=11 // pred_check_branch
        %239 = sbr.rel (%p237) target = $region20
      $region19: #{fm_forward.1} parent=11 // pred_region
        _
      $region20: #{fm_forward.1} parent=11 // pred_fallthru
        _
      // Predicated region
      $region21: #{fm_forward.1} parent=11 // pred_check
        %p240 = pneg %p130
      $region22: #{fm_forward.1} parent=11 // pred_check_branch
        %242 = sbr.rel (%p240) target = $region24
      $region23: #{fm_forward.1} parent=11 // pred_region
        _
      $region24: #{fm_forward.1} parent=11 // pred_fallthru
        _
      // Predicated region
      $region25: #{fm_forward.1} parent=11 // pred_check
        %p243 = pneg %p151
      $region26: #{fm_forward.1} parent=11 // pred_check_branch
        %245 = sbr.rel (%p243) target = $region28
      $region27: #{fm_forward.1} parent=11 // pred_region
        _
      $region28: #{fm_forward.1} parent=11 // pred_fallthru
        _
      // Predicated region
      $region29: #{fm_forward.1} parent=11 // pred_check
        %p246 = pneg %p172
      $region30: #{fm_forward.1} parent=11 // pred_check_branch
        %248 = sbr.rel (%p246) target = $region32
      $region31: #{fm_forward.1} parent=11 // pred_region
        _
      $region32: #{fm_forward.1} parent=11 // pred_fallthru
        _
      // Predicated region
      $region33: #{fm_forward.1} parent=11 // pred_check
        %p249 = pneg %p193
      $region34: #{fm_forward.1} parent=11 // pred_check_branch
        %251 = sbr.rel (%p249) target = $region36
      $region35: #{fm_forward.1} parent=11 // pred_region
        _
      $region36: #{fm_forward.1} parent=11 // pred_fallthru
        _
    $region12: #{fm_forward.1} parent=5 // pred_fallthru
      _
    %p252 = scmp.lt.s32.totalorder %s15, 2
    // Predicated region
    $region37: #{fm_forward.1} parent=5 // pred_check
      %p253 = pneg %p252
    $region38: #{fm_forward.1} parent=5 // pred_check_branch
      %255 = sbr.rel (%p253) target = $region40
    $region39: #{fm_forward.1} parent=5 // pred_region
      // Predicated region
      $region41: #{fm_forward.1} parent=39 // pred_check
        %p256 = pneg %p56
      $region42: #{fm_forward.1} parent=39 // pred_check_branch
        %258 = sbr.rel (%p256) target = $region44
      $region43: #{fm_forward.1} parent=39 // pred_region
        %p259 = scmp.lt.s32.totalorder %s15, 1
        %s260 = scalar_select %p259, %s15, 1
        %s261 = scalar_lea.vmem %s1, %s260
      $region44: #{fm_forward.1} parent=39 // pred_fallthru
        _
      // Predicated region
      $region45: #{fm_forward.1} parent=39 // pred_check
        %p262 = pneg %p82
      $region46: #{fm_forward.1} parent=39 // pred_check_branch
        %264 = sbr.rel (%p262) target = $region48
      $region47: #{fm_forward.1} parent=39 // pred_region
        %p265 = scmp.lt.s32.totalorder %s15, 1
        %s266 = scalar_select %p265, %s15, 1
        %s267 = scalar_lea.vmem %s2, %s266
      $region48: #{fm_forward.1} parent=39 // pred_fallthru
        _
    $region40: #{fm_forward.1} parent=5 // pred_fallthru
      _
    %p268 = scmp.le.s32.totalorder 1, %s15
    %p269 = scmp.lt.s32.totalorder %s15, 3
    %p270 = pnand %p268, %p269
    %p271 = pneg %p270
    // Predicated region
    $region49: #{fm_forward.1} parent=5 // pred_check
      _
    $region50: #{fm_forward.1} parent=5 // pred_check_branch
      %273 = sbr.rel (%p270) target = $region52
    $region51: #{fm_forward.1} parent=5 // pred_region
      %s274 = ssub.s32 %s15, 1
      %p275 = pneg %p36
      %p276 = pneg %p33
      %p277 = scmp.lt.s32.totalorder %s20, 1
      %s278 = scalar_select %p277, %s20, 1
      %s279 = scalar_lea.vmem %s1, %s278
      %p280 = pneg %p62
      %p281 = pneg %p59
      %p282 = scmp.lt.s32.totalorder %s20, 1
      %s283 = scalar_select %p282, %s20, 1
      %s284 = scalar_lea.vmem %s2, %s283
      %p285 = pneg %p88
      %p286 = pneg %p85
      %p287 = pneg %p109
      %p288 = pneg %p106
      %p289 = pneg %p130
      %p290 = pneg %p127
      %p291 = pneg %p151
      %p292 = pneg %p148
      %p293 = pneg %p172
      %p294 = pneg %p169
      %p295 = pneg %p193
      %p296 = pneg %p190
      %p297 = pneg %p219
      %p298 = pneg %p216
      %p299 = scmp.lt.s32.totalorder %s20, 1
      %s300 = scalar_select %p299, %s20, 1
      %s301 = scalar_lea.vmem %s8, %s300
      %p302 = scmp.lt.s32.totalorder %s20, 1
      %s303 = scalar_select %p302, %s20, 1
      %s304 = scalar_lea.vmem %s1, %s303
      %p305 = scmp.lt.s32.totalorder %s20, 1
      %s306 = scalar_select %p305, %s20, 1
      %s307 = scalar_lea.vmem %s2, %s306
      %p308 = scmp.lt.s32.totalorder %s20, 1
      %s309 = scalar_select %p308, %s20, 1
      %s310 = scalar_lea.vmem %s8, %s309
      %v311 = vlaneseq
      %v312 = vshrl.u32 %v311, 7
      %v313 = vadd.s32 %v312, 8
      %v314 = vadd.s32 %v312, 16
      %v315 = vadd.s32 %v312, 24
      %v316 = vadd.s32 %v312, 32
      %v317 = vadd.s32 %v312, 40
      %v318 = vadd.s32 %v312, 48
      %v319 = vadd.s32 %v312, 56
      %v320 = vadd.s32 %v312, 64
      %v321 = vadd.s32 %v312, 72
      %v322 = vadd.s32 %v312, 80
      %v323 = vadd.s32 %v312, 88
      %v324 = vadd.s32 %v312, 96
      %v325 = vadd.s32 %v312, 104
      %v326 = vadd.s32 %v312, 112
      %v327 = vadd.s32 %v312, 120
      %v328 = vld [vmem:[%s304] sm:$0x1]
      %v329 = vlaneseq
      %v330 = vshrl.u32 %v329, 7
      %v331 = vsub.s32 0, %v330
      %v332 = vrot.slane %v328, %v331
      %vm333 = vcmp.eq.s32.totalorder %v312, %v332
      %vm334 = vcmp.eq.s32.totalorder %v313, %v332
      %vm335 = vcmp.eq.s32.totalorder %v314, %v332
      %vm336 = vcmp.eq.s32.totalorder %v315, %v332
      %vm337 = vcmp.eq.s32.totalorder %v316, %v332
      %vm338 = vcmp.eq.s32.totalorder %v317, %v332
      %vm339 = vcmp.eq.s32.totalorder %v318, %v332
      %vm340 = vcmp.eq.s32.totalorder %v319, %v332
      %vm341 = vcmp.eq.s32.totalorder %v320, %v332
      %vm342 = vcmp.eq.s32.totalorder %v321, %v332
      %vm343 = vcmp.eq.s32.totalorder %v322, %v332
      %vm344 = vcmp.eq.s32.totalorder %v323, %v332
      %vm345 = vcmp.eq.s32.totalorder %v324, %v332
      %vm346 = vcmp.eq.s32.totalorder %v325, %v332
      %vm347 = vcmp.eq.s32.totalorder %v326, %v332
      %vm348 = vcmp.eq.s32.totalorder %v327, %v332
      %v349 = vsel %vm333, 1, 0
      %v350 = vsel %vm334, 1, 0
      %v351 = vsel %vm335, 1, 0
      %v352 = vsel %vm336, 1, 0
      %v353 = vsel %vm337, 1, 0
      %v354 = vsel %vm338, 1, 0
      %v355 = vsel %vm339, 1, 0
      %v356 = vsel %vm340, 1, 0
      %v357 = vsel %vm341, 1, 0
      %v358 = vsel %vm342, 1, 0
      %v359 = vsel %vm343, 1, 0
      %v360 = vsel %vm344, 1, 0
      %v361 = vsel %vm345, 1, 0
      %v362 = vsel %vm346, 1, 0
      %v363 = vsel %vm347, 1, 0
      %v364 = vsel %vm348, 1, 0
      %v365 = vcvt.s32.f32 %v349
      %v366 = vcvt.s32.f32 %v350
      %v367 = vcvt.s32.f32 %v351
      %v368 = vcvt.s32.f32 %v352
      %v369 = vcvt.s32.f32 %v353
      %v370 = vcvt.s32.f32 %v354
      %v371 = vcvt.s32.f32 %v355
      %v372 = vcvt.s32.f32 %v356
      %v373 = vcvt.s32.f32 %v357
      %v374 = vcvt.s32.f32 %v358
      %v375 = vcvt.s32.f32 %v359
      %v376 = vcvt.s32.f32 %v360
      %v377 = vcvt.s32.f32 %v361
      %v378 = vcvt.s32.f32 %v362
      %v379 = vcvt.s32.f32 %v363
      %v380 = vcvt.s32.f32 %v364
      %v381 = vld [vmem:[%s307] sm:$0x1]
      %v382 = vlaneseq
      %v383 = vshrl.u32 %v382, 7
      %v384 = vsub.s32 0, %v383
      %v385 = vrot.slane %v381, %v384
      %vm386 = vcmp.eq.s32.totalorder %v312, %v385
      %vm387 = vcmp.eq.s32.totalorder %v313, %v385
      %vm388 = vcmp.eq.s32.totalorder %v314, %v385
      %vm389 = vcmp.eq.s32.totalorder %v315, %v385
      %vm390 = vcmp.eq.s32.totalorder %v316, %v385
      %vm391 = vcmp.eq.s32.totalorder %v317, %v385
      %vm392 = vcmp.eq.s32.totalorder %v318, %v385
      %vm393 = vcmp.eq.s32.totalorder %v319, %v385
      %vm394 = vcmp.eq.s32.totalorder %v320, %v385
      %vm395 = vcmp.eq.s32.totalorder %v321, %v385
      %vm396 = vcmp.eq.s32.totalorder %v322, %v385
      %vm397 = vcmp.eq.s32.totalorder %v323, %v385
      %vm398 = vcmp.eq.s32.totalorder %v324, %v385
      %vm399 = vcmp.eq.s32.totalorder %v325, %v385
      %vm400 = vcmp.eq.s32.totalorder %v326, %v385
      %vm401 = vcmp.eq.s32.totalorder %v327, %v385
      %v402 = vsel %vm386, 1, 0
      %v403 = vsel %vm387, 1, 0
      %v404 = vsel %vm388, 1, 0
      %v405 = vsel %vm389, 1, 0
      %v406 = vsel %vm390, 1, 0
      %v407 = vsel %vm391, 1, 0
      %v408 = vsel %vm392, 1, 0
      %v409 = vsel %vm393, 1, 0
      %v410 = vsel %vm394, 1, 0
      %v411 = vsel %vm395, 1, 0
      %v412 = vsel %vm396, 1, 0
      %v413 = vsel %vm397, 1, 0
      %v414 = vsel %vm398, 1, 0
      %v415 = vsel %vm399, 1, 0
      %v416 = vsel %vm400, 1, 0
      %v417 = vsel %vm401, 1, 0
      %v418 = vcvt.s32.f32 %v402
      %v419 = vcvt.s32.f32 %v403
      %v420 = vcvt.s32.f32 %v404
      %v421 = vcvt.s32.f32 %v405
      %v422 = vcvt.s32.f32 %v406
      %v423 = vcvt.s32.f32 %v407
      %v424 = vcvt.s32.f32 %v408
      %v425 = vcvt.s32.f32 %v409
      %v426 = vcvt.s32.f32 %v410
      %v427 = vcvt.s32.f32 %v411
      %v428 = vcvt.s32.f32 %v412
      %v429 = vcvt.s32.f32 %v413
      %v430 = vcvt.s32.f32 %v414
      %v431 = vcvt.s32.f32 %v415
      %v432 = vcvt.s32.f32 %v416
      %v433 = vcvt.s32.f32 %v417
      %v434 = vld [vmem:[%s3] sm:$0xff]
      %v435 = vld [vmem:[%s3 + $0x8] sm:$0xff]
      %436 = vmatprep.subr.mxu0 0.0
      %437 = vmatpush1.msra.mxu0 %v380
      %438 = vmatprep.subr.mxu0 0.0
      %439 = vmatpush1.msra.mxu0 %v379
      %440 = vmatprep.subr.mxu0 0.0
      %441 = vmatpush1.msra.mxu0 %v378
      %442 = vmatprep.subr.mxu0 0.0
      %443 = vmatpush1.msra.mxu0 %v377
      %444 = vmatprep.subr.mxu0 0.0
      %445 = vmatpush1.msra.mxu0 %v376
      %446 = vmatprep.subr.mxu0 0.0
      %447 = vmatpush1.msra.mxu0 %v375
      %448 = vmatprep.subr.mxu0 0.0
      %449 = vmatpush1.msra.mxu0 %v374
      %450 = vmatprep.subr.mxu0 0.0
      %451 = vmatpush1.msra.mxu0 %v373
      %452 = vmatprep.subr.mxu0 0.0
      %453 = vmatpush1.msra.mxu0 %v372
      %454 = vmatprep.subr.mxu0 0.0
      %455 = vmatpush1.msra.mxu0 %v371
      %456 = vmatprep.subr.mxu0 0.0
      %457 = vmatpush1.msra.mxu0 %v370
      %458 = vmatprep.subr.mxu0 0.0
      %459 = vmatpush1.msra.mxu0 %v369
      %460 = vmatprep.subr.mxu0 0.0
      %461 = vmatpush1.msra.mxu0 %v368
      %462 = vmatprep.subr.mxu0 0.0
      %463 = vmatpush1.msra.mxu0 %v367
      %464 = vmatprep.subr.mxu0 0.0
      %465 = vmatpush1.msra.mxu0 %v366
      %466 = vmatprep.subr.mxu0 0.0
      %467 = vmatpush1.msra.mxu0 %v365
      %468 = vmatprep.subr.mxu0 0.0
      %469 = vmatpush2.msra.mxu0 0.0
      %470 = vmatprep.subr.mxu0 0.0
      %471 = vmatpush2.msra.mxu0 0.0
      %472 = vmatprep.subr.mxu0 0.0
      %473 = vmatpush2.msra.mxu0 0.0
      %474 = vmatprep.subr.mxu0 0.0
      %475 = vmatpush2.msra.mxu0 0.0
      %476 = vmatprep.subr.mxu0 0.0
      %477 = vmatpush2.msra.mxu0 0.0
      %478 = vmatprep.subr.mxu0 0.0
      %479 = vmatpush2.msra.mxu0 0.0
      %480 = vmatprep.subr.mxu0 0.0
      %481 = vmatpush2.msra.mxu0 0.0
      %482 = vmatprep.subr.mxu0 0.0
      %483 = vmatpush2.msra.mxu0 0.0
      %484 = vmatprep.subr.mxu0 0.0
      %485 = vmatpush2.msra.mxu0 0.0
      %486 = vmatprep.subr.mxu0 0.0
      %487 = vmatpush2.msra.mxu0 0.0
      %488 = vmatprep.subr.mxu0 0.0
      %489 = vmatpush2.msra.mxu0 0.0
      %490 = vmatprep.subr.mxu0 0.0
      %491 = vmatpush2.msra.mxu0 0.0
      %492 = vmatprep.subr.mxu0 0.0
      %493 = vmatpush2.msra.mxu0 0.0
      %494 = vmatprep.subr.mxu0 0.0
      %495 = vmatpush2.msra.mxu0 0.0
      %496 = vmatprep.subr.mxu0 0.0
      %497 = vmatpush2.msra.mxu0 0.0
      %498 = vmatprep.subr.mxu0 0.0
      %499 = vmatpush2.msra.mxu0 0.0
      %500 = vmatprep.mubr.f32.mxu0 0.0
      %501 = vmatmul.mubr.f32.gmra.mxu0 %v434
      %v502 = vpop.f32.mrf.mxu0
      %v503 = vadd.f32 0.0, %v502
      %v504 = vpop.f32.mrf.mxu0
      %505 = vmatprep.mubr.f32.mxu0 0.0
      %506 = vmatmul.mubr.f32.gmra.mxu0 %v435
      %v507 = vpop.f32.mrf.mxu0
      %v508 = vadd.f32 0.0, %v507
      %v509 = vpop.f32.mrf.mxu0
      %510 = vdwg.mxu0
      %v511 = vld [vmem:[%s4] sm:$0xff]
      %v512 = vld [vmem:[%s4 + $0x8] sm:$0xff]
      %513 = vmatprep.subr.mxu0 0.0
      %514 = vmatpush1.msra.mxu0 %v433
      %515 = vmatprep.subr.mxu0 0.0
      %516 = vmatpush1.msra.mxu0 %v432
      %517 = vmatprep.subr.mxu0 0.0
      %518 = vmatpush1.msra.mxu0 %v431
      %519 = vmatprep.subr.mxu0 0.0
      %520 = vmatpush1.msra.mxu0 %v430
      %521 = vmatprep.subr.mxu0 0.0
      %522 = vmatpush1.msra.mxu0 %v429
      %523 = vmatprep.subr.mxu0 0.0
      %524 = vmatpush1.msra.mxu0 %v428
      %525 = vmatprep.subr.mxu0 0.0
      %526 = vmatpush1.msra.mxu0 %v427
      %527 = vmatprep.subr.mxu0 0.0
      %528 = vmatpush1.msra.mxu0 %v426
      %529 = vmatprep.subr.mxu0 0.0
      %530 = vmatpush1.msra.mxu0 %v425
      %531 = vmatprep.subr.mxu0 0.0
      %532 = vmatpush1.msra.mxu0 %v424
      %533 = vmatprep.subr.mxu0 0.0
      %534 = vmatpush1.msra.mxu0 %v423
      %535 = vmatprep.subr.mxu0 0.0
      %536 = vmatpush1.msra.mxu0 %v422
      %537 = vmatprep.subr.mxu0 0.0
      %538 = vmatpush1.msra.mxu0 %v421
      %539 = vmatprep.subr.mxu0 0.0
      %540 = vmatpush1.msra.mxu0 %v420
      %541 = vmatprep.subr.mxu0 0.0
      %542 = vmatpush1.msra.mxu0 %v419
      %543 = vmatprep.subr.mxu0 0.0
      %544 = vmatpush1.msra.mxu0 %v418
      %545 = vmatprep.subr.mxu0 0.0
      %546 = vmatpush2.msra.mxu0 0.0
      %547 = vmatprep.subr.mxu0 0.0
      %548 = vmatpush2.msra.mxu0 0.0
      %549 = vmatprep.subr.mxu0 0.0
      %550 = vmatpush2.msra.mxu0 0.0
      %551 = vmatprep.subr.mxu0 0.0
      %552 = vmatpush2.msra.mxu0 0.0
      %553 = vmatprep.subr.mxu0 0.0
      %554 = vmatpush2.msra.mxu0 0.0
      %555 = vmatprep.subr.mxu0 0.0
      %556 = vmatpush2.msra.mxu0 0.0
      %557 = vmatprep.subr.mxu0 0.0
      %558 = vmatpush2.msra.mxu0 0.0
      %559 = vmatprep.subr.mxu0 0.0
      %560 = vmatpush2.msra.mxu0 0.0
      %561 = vmatprep.subr.mxu0 0.0
      %562 = vmatpush2.msra.mxu0 0.0
      %563 = vmatprep.subr.mxu0 0.0
      %564 = vmatpush2.msra.mxu0 0.0
      %565 = vmatprep.subr.mxu0 0.0
      %566 = vmatpush2.msra.mxu0 0.0
      %567 = vmatprep.subr.mxu0 0.0
      %568 = vmatpush2.msra.mxu0 0.0
      %569 = vmatprep.subr.mxu0 0.0
      %570 = vmatpush2.msra.mxu0 0.0
      %571 = vmatprep.subr.mxu0 0.0
      %572 = vmatpush2.msra.mxu0 0.0
      %573 = vmatprep.subr.mxu0 0.0
      %574 = vmatpush2.msra.mxu0 0.0
      %575 = vmatprep.subr.mxu0 0.0
      %576 = vmatpush2.msra.mxu0 0.0
      %577 = vmatprep.mubr.f32.mxu0 0.0
      %578 = vmatmul.mubr.f32.gmra.mxu0 %v511
      %v579 = vpop.f32.mrf.mxu0
      %v580 = vadd.f32 0.0, %v579
      %v581 = vpop.f32.mrf.mxu0
      %582 = vmatprep.mubr.f32.mxu0 0.0
      %583 = vmatmul.mubr.f32.gmra.mxu0 %v512
      %v584 = vpop.f32.mrf.mxu0
      %v585 = vadd.f32 0.0, %v584
      %v586 = vpop.f32.mrf.mxu0
      %587 = vdwg.mxu0
      %v588 = vld [vmem:[%s5] sm:$0xff]
      %v589 = vld [vmem:[%s5 + $0x8] sm:$0xff]
      %s590 = scalar_lea.vmem %s5, 16
      %v591 = vld [vmem:[%s590] sm:$0xff]
      %v592 = vld [vmem:[%s590 + $0x8] sm:$0xff]
      %vm593 = vcmask 130048
      %v595 = vsel %vm593, %v591, 0
      %v598 = vsel %vm593, %v592, 0
      %600 = vmatprep.subr.mxu0 0.0
      %601 = vmatpush1.msra.mxu0 0.0
      %602 = vmatprep.subr.mxu0 0.0
      %603 = vmatpush1.msra.mxu0 0.0
      %604 = vmatprep.subr.mxu0 0.0
      %605 = vmatpush1.msra.mxu0 0.0
      %606 = vmatprep.subr.mxu0 0.0
      %607 = vmatpush1.msra.mxu0 0.0
      %608 = vmatprep.subr.mxu0 0.0
      %609 = vmatpush1.msra.mxu0 0.0
      %610 = vmatprep.subr.mxu0 0.0
      %611 = vmatpush1.msra.mxu0 0.0
      %612 = vmatprep.subr.mxu0 0.0
      %613 = vmatpush1.msra.mxu0 0.0
      %614 = vmatprep.subr.mxu0 0.0
      %615 = vmatpush1.msra.mxu0 0.0
      %616 = vmatprep.subr.mxu0 0.0
      %617 = vmatpush1.msra.mxu0 0.0
      %618 = vmatprep.subr.mxu0 0.0
      %619 = vmatpush1.msra.mxu0 0.0
      %620 = vmatprep.subr.mxu0 0.0
      %621 = vmatpush1.msra.mxu0 0.0
      %622 = vmatprep.subr.mxu0 0.0
      %623 = vmatpush1.msra.mxu0 0.0
      %624 = vmatprep.subr.mxu0 0.0
      %625 = vmatpush1.msra.mxu0 0.0
      %626 = vmatprep.subr.mxu0 0.0
      %627 = vmatpush1.msra.mxu0 0.0
      %628 = vmatprep.subr.mxu0 0.0
      %629 = vmatpush1.msra.mxu0 %v585
      %630 = vmatprep.subr.mxu0 0.0
      %631 = vmatpush1.msra.mxu0 %v580
      %632 = vmatprep.subr.mxu0 0.0
      %633 = vmatpush2.msra.mxu0 0.0
      %634 = vmatprep.subr.mxu0 0.0
      %635 = vmatpush2.msra.mxu0 0.0
      %636 = vmatprep.subr.mxu0 0.0
      %637 = vmatpush2.msra.mxu0 0.0
      %638 = vmatprep.subr.mxu0 0.0
      %639 = vmatpush2.msra.mxu0 0.0
      %640 = vmatprep.subr.mxu0 0.0
      %641 = vmatpush2.msra.mxu0 0.0
      %642 = vmatprep.subr.mxu0 0.0
      %643 = vmatpush2.msra.mxu0 0.0
      %644 = vmatprep.subr.mxu0 0.0
      %645 = vmatpush2.msra.mxu0 0.0
      %646 = vmatprep.subr.mxu0 0.0
      %647 = vmatpush2.msra.mxu0 0.0
      %648 = vmatprep.subr.mxu0 0.0
      %649 = vmatpush2.msra.mxu0 0.0
      %650 = vmatprep.subr.mxu0 0.0
      %651 = vmatpush2.msra.mxu0 0.0
      %652 = vmatprep.subr.mxu0 0.0
      %653 = vmatpush2.msra.mxu0 0.0
      %654 = vmatprep.subr.mxu0 0.0
      %655 = vmatpush2.msra.mxu0 0.0
      %656 = vmatprep.subr.mxu0 0.0
      %657 = vmatpush2.msra.mxu0 0.0
      %658 = vmatprep.subr.mxu0 0.0
      %659 = vmatpush2.msra.mxu0 0.0
      %660 = vmatprep.subr.mxu0 0.0
      %661 = vmatpush2.msra.mxu0 0.0
      %662 = vmatprep.subr.mxu0 0.0
      %663 = vmatpush2.msra.mxu0 0.0
      %664 = vmatprep.mubr.f32.mxu0 0.0
      %665 = vmatmul.mubr.f32.gmra.mxu0 %v595
      %v666 = vpop.f32.mrf.mxu0
      %v667 = vadd.f32 0.0, %v666
      %v668 = vpop.f32.mrf.mxu0
      %669 = vmatprep.mubr.f32.mxu0 0.0
      %670 = vmatmul.mubr.f32.gmra.mxu0 %v598
      %v671 = vpop.f32.mrf.mxu0
      %v672 = vadd.f32 0.0, %v671
      %v673 = vpop.f32.mrf.mxu0
      %674 = vdwg.mxu0
      %v676 = vsel %vm593, %v588, 0
      %v679 = vsel %vm593, %v589, 0
      %681 = vmatprep.subr.mxu0 0.0
      %682 = vmatpush1.msra.mxu0 0.0
      %683 = vmatprep.subr.mxu0 0.0
      %684 = vmatpush1.msra.mxu0 0.0
      %685 = vmatprep.subr.mxu0 0.0
      %686 = vmatpush1.msra.mxu0 0.0
      %687 = vmatprep.subr.mxu0 0.0
      %688 = vmatpush1.msra.mxu0 0.0
      %689 = vmatprep.subr.mxu0 0.0
      %690 = vmatpush1.msra.mxu0 0.0
      %691 = vmatprep.subr.mxu0 0.0
      %692 = vmatpush1.msra.mxu0 0.0
      %693 = vmatprep.subr.mxu0 0.0
      %694 = vmatpush1.msra.mxu0 0.0
      %695 = vmatprep.subr.mxu0 0.0
      %696 = vmatpush1.msra.mxu0 0.0
      %697 = vmatprep.subr.mxu0 0.0
      %698 = vmatpush1.msra.mxu0 0.0
      %699 = vmatprep.subr.mxu0 0.0
      %700 = vmatpush1.msra.mxu0 0.0
      %701 = vmatprep.subr.mxu0 0.0
      %702 = vmatpush1.msra.mxu0 0.0
      %703 = vmatprep.subr.mxu0 0.0
      %704 = vmatpush1.msra.mxu0 0.0
      %705 = vmatprep.subr.mxu0 0.0
      %706 = vmatpush1.msra.mxu0 0.0
      %707 = vmatprep.subr.mxu0 0.0
      %708 = vmatpush1.msra.mxu0 0.0
      %709 = vmatprep.subr.mxu0 0.0
      %710 = vmatpush1.msra.mxu0 %v508
      %711 = vmatprep.subr.mxu0 0.0
      %712 = vmatpush1.msra.mxu0 %v503
      %713 = vmatprep.subr.mxu0 0.0
      %714 = vmatpush2.msra.mxu0 0.0
      %715 = vmatprep.subr.mxu0 0.0
      %716 = vmatpush2.msra.mxu0 0.0
      %717 = vmatprep.subr.mxu0 0.0
      %718 = vmatpush2.msra.mxu0 0.0
      %719 = vmatprep.subr.mxu0 0.0
      %720 = vmatpush2.msra.mxu0 0.0
      %721 = vmatprep.subr.mxu0 0.0
      %722 = vmatpush2.msra.mxu0 0.0
      %723 = vmatprep.subr.mxu0 0.0
      %724 = vmatpush2.msra.mxu0 0.0
      %725 = vmatprep.subr.mxu0 0.0
      %726 = vmatpush2.msra.mxu0 0.0
      %727 = vmatprep.subr.mxu0 0.0
      %728 = vmatpush2.msra.mxu0 0.0
      %729 = vmatprep.subr.mxu0 0.0
      %730 = vmatpush2.msra.mxu0 0.0
      %731 = vmatprep.subr.mxu0 0.0
      %732 = vmatpush2.msra.mxu0 0.0
      %733 = vmatprep.subr.mxu0 0.0
      %734 = vmatpush2.msra.mxu0 0.0
      %735 = vmatprep.subr.mxu0 0.0
      %736 = vmatpush2.msra.mxu0 0.0
      %737 = vmatprep.subr.mxu0 0.0
      %738 = vmatpush2.msra.mxu0 0.0
      %739 = vmatprep.subr.mxu0 0.0
      %740 = vmatpush2.msra.mxu0 0.0
      %741 = vmatprep.subr.mxu0 0.0
      %742 = vmatpush2.msra.mxu0 0.0
      %743 = vmatprep.subr.mxu0 0.0
      %744 = vmatpush2.msra.mxu0 0.0
      %745 = vmatprep.mubr.f32.mxu0 0.0
      %746 = vmatmul.mubr.f32.gmra.mxu0 %v676
      %v747 = vpop.f32.mrf.mxu0
      %v748 = vadd.f32 %v667, %v747
      %v749 = vpop.f32.mrf.mxu0
      %750 = vmatprep.mubr.f32.mxu0 0.0
      %751 = vmatmul.mubr.f32.gmra.mxu0 %v679
      %v752 = vpop.f32.mrf.mxu0
      %v753 = vadd.f32 %v672, %v752
      %v754 = vpop.f32.mrf.mxu0
      %755 = vdwg.mxu0
      %s756 = scalar_lea.vmem %s5, 32
      %v757 = vld [vmem:[%s756] sm:$0xff]
      %v758 = vld [vmem:[%s756 + $0x8] sm:$0xff]
      %v759 = vmul.f32 %v503, %v503
      %v760 = vmul.f32 %v508, %v508
      %v762 = vsel %vm593, %v757, 0
      %v765 = vsel %vm593, %v758, 0
      %767 = vmatprep.subr.mxu0 0.0
      %768 = vmatpush1.msra.mxu0 0.0
      %769 = vmatprep.subr.mxu0 0.0
      %770 = vmatpush1.msra.mxu0 0.0
      %771 = vmatprep.subr.mxu0 0.0
      %772 = vmatpush1.msra.mxu0 0.0
      %773 = vmatprep.subr.mxu0 0.0
      %774 = vmatpush1.msra.mxu0 0.0
      %775 = vmatprep.subr.mxu0 0.0
      %776 = vmatpush1.msra.mxu0 0.0
      %777 = vmatprep.subr.mxu0 0.0
      %778 = vmatpush1.msra.mxu0 0.0
      %779 = vmatprep.subr.mxu0 0.0
      %780 = vmatpush1.msra.mxu0 0.0
      %781 = vmatprep.subr.mxu0 0.0
      %782 = vmatpush1.msra.mxu0 0.0
      %783 = vmatprep.subr.mxu0 0.0
      %784 = vmatpush1.msra.mxu0 0.0
      %785 = vmatprep.subr.mxu0 0.0
      %786 = vmatpush1.msra.mxu0 0.0
      %787 = vmatprep.subr.mxu0 0.0
      %788 = vmatpush1.msra.mxu0 0.0
      %789 = vmatprep.subr.mxu0 0.0
      %790 = vmatpush1.msra.mxu0 0.0
      %791 = vmatprep.subr.mxu0 0.0
      %792 = vmatpush1.msra.mxu0 0.0
      %793 = vmatprep.subr.mxu0 0.0
      %794 = vmatpush1.msra.mxu0 0.0
      %795 = vmatprep.subr.mxu0 0.0
      %796 = vmatpush1.msra.mxu0 %v760
      %797 = vmatprep.subr.mxu0 0.0
      %798 = vmatpush1.msra.mxu0 %v759
      %799 = vmatprep.subr.mxu0 0.0
      %800 = vmatpush2.msra.mxu0 0.0
      %801 = vmatprep.subr.mxu0 0.0
      %802 = vmatpush2.msra.mxu0 0.0
      %803 = vmatprep.subr.mxu0 0.0
      %804 = vmatpush2.msra.mxu0 0.0
      %805 = vmatprep.subr.mxu0 0.0
      %806 = vmatpush2.msra.mxu0 0.0
      %807 = vmatprep.subr.mxu0 0.0
      %808 = vmatpush2.msra.mxu0 0.0
      %809 = vmatprep.subr.mxu0 0.0
      %810 = vmatpush2.msra.mxu0 0.0
      %811 = vmatprep.subr.mxu0 0.0
      %812 = vmatpush2.msra.mxu0 0.0
      %813 = vmatprep.subr.mxu0 0.0
      %814 = vmatpush2.msra.mxu0 0.0
      %815 = vmatprep.subr.mxu0 0.0
      %816 = vmatpush2.msra.mxu0 0.0
      %817 = vmatprep.subr.mxu0 0.0
      %818 = vmatpush2.msra.mxu0 0.0
      %819 = vmatprep.subr.mxu0 0.0
      %820 = vmatpush2.msra.mxu0 0.0
      %821 = vmatprep.subr.mxu0 0.0
      %822 = vmatpush2.msra.mxu0 0.0
      %823 = vmatprep.subr.mxu0 0.0
      %824 = vmatpush2.msra.mxu0 0.0
      %825 = vmatprep.subr.mxu0 0.0
      %826 = vmatpush2.msra.mxu0 0.0
      %827 = vmatprep.subr.mxu0 0.0
      %828 = vmatpush2.msra.mxu0 0.0
      %829 = vmatprep.subr.mxu0 0.0
      %830 = vmatpush2.msra.mxu0 0.0
      %831 = vmatprep.mubr.f32.mxu0 0.0
      %832 = vmatmul.mubr.f32.gmra.mxu0 %v762
      %v833 = vpop.f32.mrf.mxu0
      %v834 = vadd.f32 0.0, %v833
      %v835 = vpop.f32.mrf.mxu0
      %836 = vmatprep.mubr.f32.mxu0 0.0
      %837 = vmatmul.mubr.f32.gmra.mxu0 %v765
      %v838 = vpop.f32.mrf.mxu0
      %v839 = vadd.f32 0.0, %v838
      %v840 = vpop.f32.mrf.mxu0
      %841 = vdwg.mxu0
      %v842 = vadd.f32 %v748, %v834
      %v843 = vadd.f32 %v753, %v839
      %s844 = scalar_lea.vmem %s5, 48
      %v845 = vld [vmem:[%s844] sm:$0xff]
      %v846 = vld [vmem:[%s844 + $0x8] sm:$0xff]
      %v847 = vmul.f32 %v580, %v580
      %v848 = vmul.f32 %v585, %v585
      %v850 = vsel %vm593, %v845, 0
      %v853 = vsel %vm593, %v846, 0
      %855 = vmatprep.subr.mxu0 0.0
      %856 = vmatpush1.msra.mxu0 0.0
      %857 = vmatprep.subr.mxu0 0.0
      %858 = vmatpush1.msra.mxu0 0.0
      %859 = vmatprep.subr.mxu0 0.0
      %860 = vmatpush1.msra.mxu0 0.0
      %861 = vmatprep.subr.mxu0 0.0
      %862 = vmatpush1.msra.mxu0 0.0
      %863 = vmatprep.subr.mxu0 0.0
      %864 = vmatpush1.msra.mxu0 0.0
      %865 = vmatprep.subr.mxu0 0.0
      %866 = vmatpush1.msra.mxu0 0.0
      %867 = vmatprep.subr.mxu0 0.0
      %868 = vmatpush1.msra.mxu0 0.0
      %869 = vmatprep.subr.mxu0 0.0
      %870 = vmatpush1.msra.mxu0 0.0
      %871 = vmatprep.subr.mxu0 0.0
      %872 = vmatpush1.msra.mxu0 0.0
      %873 = vmatprep.subr.mxu0 0.0
      %874 = vmatpush1.msra.mxu0 0.0
      %875 = vmatprep.subr.mxu0 0.0
      %876 = vmatpush1.msra.mxu0 0.0
      %877 = vmatprep.subr.mxu0 0.0
      %878 = vmatpush1.msra.mxu0 0.0
      %879 = vmatprep.subr.mxu0 0.0
      %880 = vmatpush1.msra.mxu0 0.0
      %881 = vmatprep.subr.mxu0 0.0
      %882 = vmatpush1.msra.mxu0 0.0
      %883 = vmatprep.subr.mxu0 0.0
      %884 = vmatpush1.msra.mxu0 %v848
      %885 = vmatprep.subr.mxu0 0.0
      %886 = vmatpush1.msra.mxu0 %v847
      %887 = vmatprep.subr.mxu0 0.0
      %888 = vmatpush2.msra.mxu0 0.0
      %889 = vmatprep.subr.mxu0 0.0
      %890 = vmatpush2.msra.mxu0 0.0
      %891 = vmatprep.subr.mxu0 0.0
      %892 = vmatpush2.msra.mxu0 0.0
      %893 = vmatprep.subr.mxu0 0.0
      %894 = vmatpush2.msra.mxu0 0.0
      %895 = vmatprep.subr.mxu0 0.0
      %896 = vmatpush2.msra.mxu0 0.0
      %897 = vmatprep.subr.mxu0 0.0
      %898 = vmatpush2.msra.mxu0 0.0
      %899 = vmatprep.subr.mxu0 0.0
      %900 = vmatpush2.msra.mxu0 0.0
      %901 = vmatprep.subr.mxu0 0.0
      %902 = vmatpush2.msra.mxu0 0.0
      %903 = vmatprep.subr.mxu0 0.0
      %904 = vmatpush2.msra.mxu0 0.0
      %905 = vmatprep.subr.mxu0 0.0
      %906 = vmatpush2.msra.mxu0 0.0
      %907 = vmatprep.subr.mxu0 0.0
      %908 = vmatpush2.msra.mxu0 0.0
      %909 = vmatprep.subr.mxu0 0.0
      %910 = vmatpush2.msra.mxu0 0.0
      %911 = vmatprep.subr.mxu0 0.0
      %912 = vmatpush2.msra.mxu0 0.0
      %913 = vmatprep.subr.mxu0 0.0
      %914 = vmatpush2.msra.mxu0 0.0
      %915 = vmatprep.subr.mxu0 0.0
      %916 = vmatpush2.msra.mxu0 0.0
      %917 = vmatprep.subr.mxu0 0.0
      %918 = vmatpush2.msra.mxu0 0.0
      %919 = vmatprep.mubr.f32.mxu0 0.0
      %920 = vmatmul.mubr.f32.gmra.mxu0 %v850
      %v921 = vpop.f32.mrf.mxu0
      %v922 = vadd.f32 0.0, %v921
      %v923 = vpop.f32.mrf.mxu0
      %924 = vmatprep.mubr.f32.mxu0 0.0
      %925 = vmatmul.mubr.f32.gmra.mxu0 %v853
      %v926 = vpop.f32.mrf.mxu0
      %v927 = vadd.f32 0.0, %v926
      %v928 = vpop.f32.mrf.mxu0
      %929 = vdwg.mxu0
      %v930 = vadd.f32 %v842, %v922
      %v931 = vadd.f32 %v843, %v927
      %v932 = vmul.f32 %v930, %v930
      %v933 = vmul.f32 %v931, %v931
      %v934 = vld [vmem:[%s6] sm:$0xff]
      %v935 = vld [vmem:[%s6 + $0x8] sm:$0xff]
      %937 = vset.pattern.permute.xlu0 0
      %938 = vperm.xlu0 %937, %v934
      %v939 = vpop.permute.xlu0 %938
      %942 = vset.pattern.permute.xlu0 0
      %943 = vperm.xlu0 %942, %v935
      %v944 = vpop.permute.xlu0 %943
      %v946 = vmul.f32 %v932, %v939
      %v947 = vmul.f32 %v933, %v944
      %v948 = vld [vmem:[%s7] sm:$0xff]
      %v949 = vld [vmem:[%s7 + $0x8] sm:$0xff]
      %951 = vset.pattern.permute.xlu0 0
      %952 = vperm.xlu0 %951, %v948
      %v953 = vpop.permute.xlu0 %952
      %956 = vset.pattern.permute.xlu0 0
      %957 = vperm.xlu0 %956, %v949
      %v958 = vpop.permute.xlu0 %957
      %v960 = vmul.f32 %v930, %v953
      %v961 = vmul.f32 %v931, %v958
      %v962 = vadd.f32 %v946, %v960
      %v963 = vadd.f32 %v947, %v961
      %v964 = vadd.f32 %v962, %v963
      %v965 = vrot.slane %v964, 4
      %v966 = vadd.f32 %v964, %v965
      %v967 = vrot.slane %v966, 2
      %v968 = vadd.f32 %v966, %v967
      %v969 = vrot.slane %v968, 1
      %v970 = vadd.f32 %v968, %v969
      %s971 = sld [smem:[#allocation2]]
      %v972 = vstv %s971
      %v973 = vadd.f32 %v970, %v972
      %974 = vst [vmem:[%s310] sm:$0x1] %v973
      %p975 = scmp.lt.s32.totalorder %s20, 1
      %s976 = scalar_select %p975, %s20, 1
      %s977 = scalar_lea.vmem %s8, %s976
      // Predicated region
      $region53: #{fm_forward.1} parent=51 // pred_check
        %p978 = pneg %p216
      $region54: #{fm_forward.1} parent=51 // pred_check_branch
        %980 = sbr.rel (%p978) target = $region56
      $region55: #{fm_forward.1} parent=51 // pred_region
        _
      $region56: #{fm_forward.1} parent=51 // pred_fallthru
        _
    $region52: #{fm_forward.1} parent=5 // pred_fallthru
      _
    %p981 = scmp.le.s32.totalorder 2, %s15
    // Predicated region
    $region57: #{fm_forward.1} parent=5 // pred_check
      %p982 = pneg %p981
    $region58: #{fm_forward.1} parent=5 // pred_check_branch
      %984 = sbr.rel (%p982) target = $region60
    $region59: #{fm_forward.1} parent=5 // pred_region
      %s985 = ssub.s32 %s15, 2
      // Predicated region
      $region61: #{fm_forward.1} parent=59 // pred_check
        %p986 = pneg %p222
      $region62: #{fm_forward.1} parent=59 // pred_check_branch
        %988 = sbr.rel (%p986) target = $region64
      $region63: #{fm_forward.1} parent=59 // pred_region
        %p989 = scmp.lt.s32.totalorder %s21, 1
        %s990 = scalar_select %p989, %s21, 1
        %s991 = scalar_lea.vmem %s8, %s990
      $region64: #{fm_forward.1} parent=59 // pred_fallthru
        _
    $region60: #{fm_forward.1} parent=5 // pred_fallthru
      _
  $region6: #{fm_forward.1} parent=0 // loop_footer
    %s19 = sadd.s32 1, %s15
  $region7: #{fm_forward.1} parent=0 // loop_footer_branch
    %14 = sbr.rel target = $region3
  $region8: #{fm_forward.1} parent=0 // loop_exit
    _

</llo_original>
